<compile_context>
chip_gen: v7x
topology: tpu7x:2x2x1
jax: 0.10.0
libtpu: 0.0.40
codegen_flags: <defaults>
</compile_context>

<pallas_src>
import jax
import jax.numpy as jnp
from jax.experimental import pallas as pl
from jax.experimental.pallas import tpu as pltpu


_SCALED_SILU_FACTOR = 1.0 / 0.6      # GemNet ScaledSiLU scale (folded into Wu)
_SUBLANE = 8
_MAX_ROW_TILE = 2048                 # rows per grid step, upper cap
_TILE_VMEM_BUDGET = 8 * 1024 * 1024  # bytes for double-buffered x + out tiles
_VMEM_LIMIT_BYTES = 32 * 1024 * 1024  # safe on v5e/v6e (128 MiB) and v7x (64 MiB)


def _cdiv(a, b):
    return -(-a // b)


def _round_up(x, m):
    return _cdiv(x, m) * m


def _choose_row_tile(n_rows, feat, itemsize,
                     max_row_tile=_MAX_ROW_TILE,
                     vmem_budget=_TILE_VMEM_BUDGET):
    """Pick a row tile: as large as the VMEM budget allows, multiple of 8,
    no larger than the (rounded-up) row count, and preferring an even number
    of grid steps so v7x's two TensorCores both stay busy."""
    bytes_per_row = 4 * feat * itemsize          # x + out tiles, double-buffered
    cap = max(_SUBLANE, (vmem_budget // bytes_per_row) // _SUBLANE * _SUBLANE)
    tile = min(max_row_tile, cap, _round_up(n_rows, _SUBLANE))
    tile = max(_SUBLANE, tile // _SUBLANE * _SUBLANE)

    n_tiles = _cdiv(n_rows, tile)
    if n_tiles % 2 == 1 and n_rows > _SUBLANE:
        # try an even tile count (>= 2): helps v7x core balance, free elsewhere
        cand = _round_up(_cdiv(n_rows, n_tiles + 1), _SUBLANE)
        if cand >= _SUBLANE and _cdiv(n_rows, cand) % 2 == 0:
            tile = cand
    return tile


def _adapter_kernel(x_ref, wd_ref, bd_ref, wu_ref, bu_ref, o_ref):
    """One row-tile of:  out = silu(x @ Wd + bd) @ (Wu / 0.6) + bu + x.

    The ScaledSiLU factor is pre-folded into Wu by the wrapper.  Matmuls
    accumulate in f32; sigmoid / residual math is f32 regardless of the I/O
    dtype (v5e's VPU/EUP have no bf16).
    """
    x = x_ref[...]                                                  # [tile, E]
    z = jnp.dot(x, wd_ref[...], preferred_element_type=jnp.float32)
    z = z + bd_ref[...]                                             # [tile, A] f32
    z = z * jax.nn.sigmoid(z)                                       # SiLU (f32)
    z = z.astype(wu_ref.dtype)                                      # bf16 MXU input in bf16 mode
    y = jnp.dot(z, wu_ref[...], preferred_element_type=jnp.float32)
    y = y + bu_ref[...]                                             # [tile, E] f32
    o_ref[...] = (y + x.astype(jnp.float32)).astype(o_ref.dtype)


def _adapter_path(x, w_down, b_down, w_up, b_up, *, io_dtype=None):
    """out = up_project(ScaledSiLU(down_project(x))) + x  for one path."""
    n, e = x.shape
    a = w_down.shape[1]

    # Fold the ScaledSiLU 1/0.6 factor into the up-projection weight (one-time).
    w_up_scaled = w_up * _SCALED_SILU_FACTOR

    if io_dtype is None:
        x_in, wd_in, wu_in = x, w_down, w_up_scaled
        out_dtype = x.dtype
    else:
        # Opt-in reduced-precision storage: halves HBM traffic; accumulation
        # and activation math stay f32 inside the kernel.
        x_in = x.astype(io_dtype)
        wd_in = w_down.astype(io_dtype)
        wu_in = w_up_scaled.astype(io_dtype)
        out_dtype = io_dtype

    bd_in = b_down.reshape(1, a).astype(jnp.float32)
    bu_in = b_up.reshape(1, e).astype(jnp.float32)

    itemsize = jnp.dtype(x_in.dtype).itemsize
    row_tile = _choose_row_tile(n, e, itemsize)
    grid = (_cdiv(n, row_tile),)

    return pl.pallas_call(
        _adapter_kernel,
        out_shape=jax.ShapeDtypeStruct((n, e), out_dtype),
        grid=grid,
        in_specs=[
            pl.BlockSpec((row_tile, e), lambda i: (i, 0)),   # x row tile
            pl.BlockSpec((e, a), lambda i: (0, 0)),          # W_down (resident)
            pl.BlockSpec((1, a), lambda i: (0, 0)),          # b_down (resident)
            pl.BlockSpec((a, e), lambda i: (0, 0)),          # W_up   (resident)
            pl.BlockSpec((1, e), lambda i: (0, 0)),          # b_up   (resident)
        ],
        out_specs=pl.BlockSpec((row_tile, e), lambda i: (i, 0)),
        compiler_params=pltpu.CompilerParams(
            dimension_semantics=("parallel",),      # row tiles shard across v7x TCs
            vmem_limit_bytes=_VMEM_LIMIT_BYTES,     # actual use is a few MiB
        ),
    )(x_in, wd_in, bd_in, wu_in, bu_in)


def adapter_block_forward(params, h, m, *, io_dtype=None):
    """AdapterBlock forward: (h_a, m_a), one pallas_call per path on the
    natural (unpadded) arrays.  Set io_dtype=jnp.bfloat16 for the reduced-
    precision storage mode (v6e/v7x ~2x HBM win; v5e storage-only bf16)."""
    h_a = _adapter_path(h, params["down_e_w"], params["down_e_b"],
                        params["up_e_w"], params["up_e_b"], io_dtype=io_dtype)
    m_a = _adapter_path(m, params["down_f_w"], params["down_f_b"],
                        params["up_f_w"], params["up_f_b"], io_dtype=io_dtype)
    return h_a, m_a


def xavier_uniform(key, in_features, out_features, gain):
    # torch xavier_uniform_: U(-a, a), a = gain * sqrt(6 / (fan_in + fan_out))
    bound = gain * (6.0 / (in_features + out_features)) ** 0.5
    # stored as [in, out] so forward is x @ W (equivalent to torch x @ W.T)
    return jax.random.uniform(
        key, (in_features, out_features), jnp.float32, -bound, bound)


def make_adapter_block_params(key, emb_size_atom, emb_size_edge, adapter_dim,
                              initializer_gain):
    k1, k2, k3, k4 = jax.random.split(key, 4)
    return {
        "down_e_w": xavier_uniform(k1, emb_size_atom, adapter_dim, initializer_gain),
        "down_e_b": jnp.zeros((adapter_dim,), jnp.float32),
        "up_e_w": xavier_uniform(k2, adapter_dim, emb_size_atom, initializer_gain),
        "up_e_b": jnp.zeros((emb_size_atom,), jnp.float32),
        "down_f_w": xavier_uniform(k3, emb_size_edge, adapter_dim, initializer_gain),
        "down_f_b": jnp.zeros((adapter_dim,), jnp.float32),
        "up_f_w": xavier_uniform(k4, adapter_dim, emb_size_edge, initializer_gain),
        "up_f_b": jnp.zeros((emb_size_edge,), jnp.float32),
    }


def adapter_block_reference(params, h, m):
    """Pure-JAX reference matching the PyTorch forward."""
    def path(x, wd, bd, wu, bu):
        z = x @ wd + bd
        z = jax.nn.silu(z) * _SCALED_SILU_FACTOR
        y = z @ wu + bu
        return y + x
    return (path(h, params["down_e_w"], params["down_e_b"],
                 params["up_e_w"], params["up_e_b"]),
            path(m, params["down_f_w"], params["down_f_b"],
                 params["up_f_w"], params["up_f_b"]))


if __name__ == "__main__":
    # Small shapes consistent with the module's forward.
    emb_size_atom = 32
    emb_size_edge = 64
    adapter_dim = 8
    n_atoms = 16
    n_edges = 32

    key = jax.random.PRNGKey(0)
    kp, kh, km = jax.random.split(key, 3)

    params = make_adapter_block_params(
        kp, emb_size_atom, emb_size_edge, adapter_dim, initializer_gain=0.001)

    h = jax.random.normal(kh, (n_atoms, emb_size_atom), jnp.float32)
    m = jax.random.normal(km, (n_edges, emb_size_edge), jnp.float32)

    fwd = jax.jit(adapter_block_forward)
    h_a, m_a = fwd(params, h, m)
    jax.block_until_ready((h_a, m_a))

    # correctness check against pure-JAX reference (f32 end-to-end path)
    h_ref, m_ref = adapter_block_reference(params, h, m)
    assert h_a.shape == h.shape and m_a.shape == m.shape
    assert jnp.allclose(h_a, h_ref, atol=1e-5, rtol=1e-5)
    assert jnp.allclose(m_a, m_ref, atol=1e-5, rtol=1e-5)

    print("KERNEL_OK")
</pallas_src>

<mosaic_0001>
module attributes {stable_mosaic.version = 11 : i64} {
  func.func @_adapter_kernel(%arg0: i32, %arg1: memref<16x64xf32, #tpu.memory_space<vmem>>, %arg2: memref<64x8xf32, #tpu.memory_space<vmem>>, %arg3: memref<1x8xf32, #tpu.memory_space<vmem>>, %arg4: memref<8x64xf32, #tpu.memory_space<vmem>>, %arg5: memref<1x64xf32, #tpu.memory_space<vmem>>, %arg6: memref<16x64xf32, #tpu.memory_space<vmem>>) attributes {dimension_semantics = [#tpu.dimension_semantics<parallel>], iteration_bounds = array<i64: 2>, scalar_prefetch = 0 : i64, scratch_operands = 0 : i64, tpu.core_type = #tpu.core_type<tc>, window_params = [{transform_indices = @transform_0, window_bounds = array<i64: 16, 64>}, {pipeline_mode = #tpu.pipeline_mode<synchronous>, transform_indices = @transform_1, window_bounds = array<i64: 64, 8>}, {pipeline_mode = #tpu.pipeline_mode<synchronous>, transform_indices = @transform_2, window_bounds = array<i64: 1, 8>}, {pipeline_mode = #tpu.pipeline_mode<synchronous>, transform_indices = @transform_3, window_bounds = array<i64: 8, 64>}, {pipeline_mode = #tpu.pipeline_mode<synchronous>, transform_indices = @transform_4, window_bounds = array<i64: 1, 64>}, {transform_indices = @transform_5, window_bounds = array<i64: 16, 64>}]} {
    %c0 = arith.constant 0 : index
    %c0_0 = arith.constant 0 : index
    %0 = vector.load %arg1[%c0, %c0_0] : memref<16x64xf32, #tpu.memory_space<vmem>>, vector<16x64xf32>
    %c0_1 = arith.constant 0 : index
    %c0_2 = arith.constant 0 : index
    %1 = vector.load %arg2[%c0_1, %c0_2] : memref<64x8xf32, #tpu.memory_space<vmem>>, vector<64x8xf32>
    %cst = arith.constant dense<0.000000e+00> : vector<16x8xf32>
    %2 = tpu.matmul %0, %1, %cst {dimension_numbers = #tpu.dot_dimension_numbers<[1], [0], [0], [1], [0, 0, 1, 1], [], []>} : vector<16x64xf32>, vector<64x8xf32>, vector<16x8xf32> -> vector<16x8xf32>
    %c0_3 = arith.constant 0 : index
    %c0_4 = arith.constant 0 : index
    %3 = vector.load %arg3[%c0_3, %c0_4] : memref<1x8xf32, #tpu.memory_space<vmem>>, vector<1x8xf32>
    %4 = vector.broadcast %3 : vector<1x8xf32> to vector<16x8xf32>
    %5 = arith.addf %2, %4 : vector<16x8xf32>
    %6 = arith.negf %5 : vector<16x8xf32>
    %7 = math.exp %6 : vector<16x8xf32>
    %cst_5 = arith.constant 1.000000e+00 : f32
    %8 = vector.broadcast %cst_5 : f32 to vector<16x8xf32>
    %9 = arith.addf %8, %7 : vector<16x8xf32>
    %10 = arith.divf %8, %9 : vector<16x8xf32>
    %11 = arith.mulf %5, %10 : vector<16x8xf32>
    %c0_6 = arith.constant 0 : index
    %c0_7 = arith.constant 0 : index
    %12 = vector.load %arg4[%c0_6, %c0_7] : memref<8x64xf32, #tpu.memory_space<vmem>>, vector<8x64xf32>
    %cst_8 = arith.constant dense<0.000000e+00> : vector<16x64xf32>
    %13 = tpu.matmul %11, %12, %cst_8 {dimension_numbers = #tpu.dot_dimension_numbers<[1], [0], [0], [1], [0, 0, 1, 1], [], []>} : vector<16x8xf32>, vector<8x64xf32>, vector<16x64xf32> -> vector<16x64xf32>
    %c0_9 = arith.constant 0 : index
    %c0_10 = arith.constant 0 : index
    %14 = vector.load %arg5[%c0_9, %c0_10] : memref<1x64xf32, #tpu.memory_space<vmem>>, vector<1x64xf32>
    %15 = vector.broadcast %14 : vector<1x64xf32> to vector<16x64xf32>
    %16 = arith.addf %13, %15 : vector<16x64xf32>
    %17 = arith.addf %16, %0 : vector<16x64xf32>
    %c0_11 = arith.constant 0 : index
    %c0_12 = arith.constant 0 : index
    %18 = vector.load %arg6[%c0_11, %c0_12] : memref<16x64xf32, #tpu.memory_space<vmem>>, vector<16x64xf32>
    tpu.vector_store %arg6[%c0_11, %c0_12], %17 {strides = array<i32>} : memref<16x64xf32, #tpu.memory_space<vmem>>, vector<16x64xf32>,
    return
  }
  func.func @transform_0(%arg0: i32) -> (i32, i32) {
    %c0_i32 = arith.constant 0 : i32
    %c0_i32_0 = arith.constant 0 : i32
    return %arg0, %c0_i32 : i32, i32
  }
  func.func @transform_1(%arg0: i32) -> (i32, i32) {
    %c0_i32 = arith.constant 0 : i32
    %c0_i32_0 = arith.constant 0 : i32
    %c0_i32_1 = arith.constant 0 : i32
    return %c0_i32, %c0_i32_0 : i32, i32
  }
  func.func @transform_2(%arg0: i32) -> (i32, i32) {
    %c0_i32 = arith.constant 0 : i32
    %c0_i32_0 = arith.constant 0 : i32
    %c0_i32_1 = arith.constant 0 : i32
    return %c0_i32, %c0_i32_0 : i32, i32
  }
  func.func @transform_3(%arg0: i32) -> (i32, i32) {
    %c0_i32 = arith.constant 0 : i32
    %c0_i32_0 = arith.constant 0 : i32
    %c0_i32_1 = arith.constant 0 : i32
    return %c0_i32, %c0_i32_0 : i32, i32
  }
  func.func @transform_4(%arg0: i32) -> (i32, i32) {
    %c0_i32 = arith.constant 0 : i32
    %c0_i32_0 = arith.constant 0 : i32
    %c0_i32_1 = arith.constant 0 : i32
    return %c0_i32, %c0_i32_0 : i32, i32
  }
  func.func @transform_5(%arg0: i32) -> (i32, i32) {
    %c0_i32 = arith.constant 0 : i32
    %c0_i32_0 = arith.constant 0 : i32
    return %arg0, %c0_i32 : i32, i32
  }
}

module attributes {stable_mosaic.version = 11 : i64} {
  func.func @_adapter_kernel(%arg0: i32, %arg1: memref<8x32xf32, #tpu.memory_space<vmem>>, %arg2: memref<32x8xf32, #tpu.memory_space<vmem>>, %arg3: memref<1x8xf32, #tpu.memory_space<vmem>>, %arg4: memref<8x32xf32, #tpu.memory_space<vmem>>, %arg5: memref<1x32xf32, #tpu.memory_space<vmem>>, %arg6: memref<8x32xf32, #tpu.memory_space<vmem>>) attributes {dimension_semantics = [#tpu.dimension_semantics<parallel>], iteration_bounds = array<i64: 2>, scalar_prefetch = 0 : i64, scratch_operands = 0 : i64, tpu.core_type = #tpu.core_type<tc>, window_params = [{transform_indices = @transform_0, window_bounds = array<i64: 8, 32>}, {pipeline_mode = #tpu.pipeline_mode<synchronous>, transform_indices = @transform_1, window_bounds = array<i64: 32, 8>}, {pipeline_mode = #tpu.pipeline_mode<synchronous>, transform_indices = @transform_2, window_bounds = array<i64: 1, 8>}, {pipeline_mode = #tpu.pipeline_mode<synchronous>, transform_indices = @transform_3, window_bounds = array<i64: 8, 32>}, {pipeline_mode = #tpu.pipeline_mode<synchronous>, transform_indices = @transform_4, window_bounds = array<i64: 1, 32>}, {transform_indices = @transform_5, window_bounds = array<i64: 8, 32>}]} {
    %c0 = arith.constant 0 : index
    %c0_0 = arith.constant 0 : index
    %0 = vector.load %arg1[%c0, %c0_0] : memref<8x32xf32, #tpu.memory_space<vmem>>, vector<8x32xf32>
    %c0_1 = arith.constant 0 : index
    %c0_2 = arith.constant 0 : index
    %1 = vector.load %arg2[%c0_1, %c0_2] : memref<32x8xf32, #tpu.memory_space<vmem>>, vector<32x8xf32>
    %cst = arith.constant dense<0.000000e+00> : vector<8x8xf32>
    %2 = tpu.matmul %0, %1, %cst {dimension_numbers = #tpu.dot_dimension_numbers<[1], [0], [0], [1], [0, 0, 1, 1], [], []>} : vector<8x32xf32>, vector<32x8xf32>, vector<8x8xf32> -> vector<8x8xf32>
    %c0_3 = arith.constant 0 : index
    %c0_4 = arith.constant 0 : index
    %3 = vector.load %arg3[%c0_3, %c0_4] : memref<1x8xf32, #tpu.memory_space<vmem>>, vector<1x8xf32>
    %4 = vector.broadcast %3 : vector<1x8xf32> to vector<8x8xf32>
    %5 = arith.addf %2, %4 : vector<8x8xf32>
    %6 = arith.negf %5 : vector<8x8xf32>
    %7 = math.exp %6 : vector<8x8xf32>
    %cst_5 = arith.constant 1.000000e+00 : f32
    %8 = vector.broadcast %cst_5 : f32 to vector<8x8xf32>
    %9 = arith.addf %8, %7 : vector<8x8xf32>
    %10 = arith.divf %8, %9 : vector<8x8xf32>
    %11 = arith.mulf %5, %10 : vector<8x8xf32>
    %c0_6 = arith.constant 0 : index
    %c0_7 = arith.constant 0 : index
    %12 = vector.load %arg4[%c0_6, %c0_7] : memref<8x32xf32, #tpu.memory_space<vmem>>, vector<8x32xf32>
    %cst_8 = arith.constant dense<0.000000e+00> : vector<8x32xf32>
    %13 = tpu.matmul %11, %12, %cst_8 {dimension_numbers = #tpu.dot_dimension_numbers<[1], [0], [0], [1], [0, 0, 1, 1], [], []>} : vector<8x8xf32>, vector<8x32xf32>, vector<8x32xf32> -> vector<8x32xf32>
    %c0_9 = arith.constant 0 : index
    %c0_10 = arith.constant 0 : index
    %14 = vector.load %arg5[%c0_9, %c0_10] : memref<1x32xf32, #tpu.memory_space<vmem>>, vector<1x32xf32>
    %15 = vector.broadcast %14 : vector<1x32xf32> to vector<8x32xf32>
    %16 = arith.addf %13, %15 : vector<8x32xf32>
    %17 = arith.addf %16, %0 : vector<8x32xf32>
    %c0_11 = arith.constant 0 : index
    %c0_12 = arith.constant 0 : index
    %18 = vector.load %arg6[%c0_11, %c0_12] : memref<8x32xf32, #tpu.memory_space<vmem>>, vector<8x32xf32>
    tpu.vector_store %arg6[%c0_11, %c0_12], %17 {strides = array<i32>} : memref<8x32xf32, #tpu.memory_space<vmem>>, vector<8x32xf32>,
    return
  }
  func.func @transform_0(%arg0: i32) -> (i32, i32) {
    %c0_i32 = arith.constant 0 : i32
    %c0_i32_0 = arith.constant 0 : i32
    return %arg0, %c0_i32 : i32, i32
  }
  func.func @transform_1(%arg0: i32) -> (i32, i32) {
    %c0_i32 = arith.constant 0 : i32
    %c0_i32_0 = arith.constant 0 : i32
    %c0_i32_1 = arith.constant 0 : i32
    return %c0_i32, %c0_i32_0 : i32, i32
  }
  func.func @transform_2(%arg0: i32) -> (i32, i32) {
    %c0_i32 = arith.constant 0 : i32
    %c0_i32_0 = arith.constant 0 : i32
    %c0_i32_1 = arith.constant 0 : i32
    return %c0_i32, %c0_i32_0 : i32, i32
  }
  func.func @transform_3(%arg0: i32) -> (i32, i32) {
    %c0_i32 = arith.constant 0 : i32
    %c0_i32_0 = arith.constant 0 : i32
    %c0_i32_1 = arith.constant 0 : i32
    return %c0_i32, %c0_i32_0 : i32, i32
  }
  func.func @transform_4(%arg0: i32) -> (i32, i32) {
    %c0_i32 = arith.constant 0 : i32
    %c0_i32_0 = arith.constant 0 : i32
    %c0_i32_1 = arith.constant 0 : i32
    return %c0_i32, %c0_i32_0 : i32, i32
  }
  func.func @transform_5(%arg0: i32) -> (i32, i32) {
    %c0_i32 = arith.constant 0 : i32
    %c0_i32_0 = arith.constant 0 : i32
    return %arg0, %c0_i32 : i32, i32
  }
}

</mosaic_0001>

<llo_original>
// kernel: adapter_block_forward.3
$region0: #{adapter_block_forward.3}
  #allocation0 [shape = 'u32[]', space=smem, size = 0x4, offset = 0x4, fixed_abs, tag = 'smem constant byte address 0x4 - core index']
  #allocation1 [shape = 'u32[144,128]{1,0:T(1,128)}', space=vmem, size = 0x12000, scoped, tag = 'internal scratch']
  %s0 = inlined_call_operand.vmem [shape: f32[32,64], index: 0, kind: input, shape index: {}]
  %s1 = inlined_call_operand.vmem [shape: f32[64,8], index: 1, kind: input, shape index: {}]
  %s2 = inlined_call_operand.vmem [shape: f32[1,8], index: 2, kind: input, shape index: {}]
  %s3 = inlined_call_operand.vmem [shape: f32[8,64], index: 3, kind: input, shape index: {}]
  %s4 = inlined_call_operand.vmem [shape: f32[1,64], index: 4, kind: input, shape index: {}]
  %s5 = inlined_call_operand.hbm [shape: f32[32,64], index: 5, kind: output, shape index: {}]
  %s6 = sld [smem:[#allocation0]]
  $region53: #{adapter_block_forward.3} parent=0
    _
  %s8 = ssub.s32 1, %s6
  %s9 = scalar_select 0, %s8, %s6
  $region1: #{adapter_block_forward.3} parent=0
    #allocation2 [shape = 'u8[16384]{0}', space=vmem, size = 0x4000, scoped, tag = 'output window, operand 0']
    #allocation3 [shape = 's32[2]{0}', space=sflag, size = 0x8, scoped, tag = 'scoped memory for adapter_block_forward.3']
    %10 = vsyncpa [#allocation3], 0
    %s11 = scalar_lea.sflag [#allocation3], 1
    %12 = vsyncpa %s11, 0
    loop: start=0, step=1, limit=4
    $region2: #{adapter_block_forward.3} parent=1 // loop_pre_header
      _
    $region3: #{adapter_block_forward.3} parent=1 // loop_header
      %s14 = sphi 0, %s18
      %p15 = scmp.ge.s32.totalorder %s14, 4
      %s24 = sphi 0, %s26
      %s27 = sphi 0, %s24
      %s28 = sphi 0, %s27
      %s44 = sphi 0, %s28
      %s48 = sphi 0, %s48
      %s50 = sphi 0, %s48
      %s51 = sphi 0, %s50
      %s65 = sphi 0, %s51
      %s69 = sphi 0, %s69
      %s71 = sphi 0, %s69
      %s72 = sphi 0, %s71
      %s86 = sphi 0, %s72
      %s90 = sphi 0, %s90
      %s92 = sphi 0, %s90
      %s93 = sphi 0, %s92
      %s107 = sphi 0, %s93
      %s111 = sphi 0, %s111
      %s113 = sphi 0, %s111
      %s114 = sphi 0, %s113
      %s128 = sphi 0, %s114
      %s134 = sphi 0, %s136
      %s137 = sphi 0, %s134
      %s138 = sphi 0, %s137
      %s154 = sphi 0, %s138
    $region4: #{adapter_block_forward.3} parent=1 // loop_header_branch
      %17 = sbr.rel (%p15) target = $region8
    $region5: #{adapter_block_forward.3} parent=1 // loop_body
      %s19 = ssub.s32 %s14, 1
      %s20 = ssub.s32 %s14, 2
      %s21 = sadd.s32 %s14, 1
      %s22 = ssub.s32 %s14, %s21
      %p23 = scmp.eq.s32.totalorder %s22, 0
      %s25 = sadd.s32 %s24, 1
      %s26 = scalar_select %p23, %s24, %s25
      %p29 = pneg %p23
      %p30 = scmp.eq.s32.totalorder %s14, 1
      %p31 = por %p29, %p30
      %p32 = scmp.ne.s32.totalorder %s24, %s27
      %p33 = scmp.eq.s32.totalorder %s14, 0
      %p34 = por %p32, %p33
      %p35 = scmp.ne.s32.totalorder %s24, %s27
      %p36 = scmp.eq.s32.totalorder %s19, 1
      %p37 = por %p35, %p36
      %p38 = scmp.ne.s32.totalorder %s27, %s28
      %p39 = scmp.eq.s32.totalorder %s19, 0
      %p40 = por %p38, %p39
      %p41 = scmp.ne.s32.totalorder %s27, %s28
      %p42 = scmp.eq.s32.totalorder %s20, 1
      %p43 = por %p41, %p42
      %p45 = scmp.ne.s32.totalorder %s28, %s44
      %p46 = scmp.eq.s32.totalorder %s20, 0
      %p47 = por %p45, %p46
      %s49 = sadd.s32 %s48, 1
      %p52 = scmp.eq.s32.totalorder %s14, 1
      %p53 = scmp.ne.s32.totalorder %s48, %s50
      %p54 = scmp.eq.s32.totalorder %s14, 0
      %p55 = por %p53, %p54
      %p56 = scmp.ne.s32.totalorder %s48, %s50
      %p57 = scmp.eq.s32.totalorder %s19, 1
      %p58 = por %p56, %p57
      %p59 = scmp.ne.s32.totalorder %s50, %s51
      %p60 = scmp.eq.s32.totalorder %s19, 0
      %p61 = por %p59, %p60
      %p62 = scmp.ne.s32.totalorder %s50, %s51
      %p63 = scmp.eq.s32.totalorder %s20, 1
      %p64 = por %p62, %p63
      %p66 = scmp.ne.s32.totalorder %s51, %s65
      %p67 = scmp.eq.s32.totalorder %s20, 0
      %p68 = por %p66, %p67
      %s70 = sadd.s32 %s69, 1
      %p73 = scmp.eq.s32.totalorder %s14, 1
      %p74 = scmp.ne.s32.totalorder %s69, %s71
      %p75 = scmp.eq.s32.totalorder %s14, 0
      %p76 = por %p74, %p75
      %p77 = scmp.ne.s32.totalorder %s69, %s71
      %p78 = scmp.eq.s32.totalorder %s19, 1
      %p79 = por %p77, %p78
      %p80 = scmp.ne.s32.totalorder %s71, %s72
      %p81 = scmp.eq.s32.totalorder %s19, 0
      %p82 = por %p80, %p81
      %p83 = scmp.ne.s32.totalorder %s71, %s72
      %p84 = scmp.eq.s32.totalorder %s20, 1
      %p85 = por %p83, %p84
      %p87 = scmp.ne.s32.totalorder %s72, %s86
      %p88 = scmp.eq.s32.totalorder %s20, 0
      %p89 = por %p87, %p88
      %s91 = sadd.s32 %s90, 1
      %p94 = scmp.eq.s32.totalorder %s14, 1
      %p95 = scmp.ne.s32.totalorder %s90, %s92
      %p96 = scmp.eq.s32.totalorder %s14, 0
      %p97 = por %p95, %p96
      %p98 = scmp.ne.s32.totalorder %s90, %s92
      %p99 = scmp.eq.s32.totalorder %s19, 1
      %p100 = por %p98, %p99
      %p101 = scmp.ne.s32.totalorder %s92, %s93
      %p102 = scmp.eq.s32.totalorder %s19, 0
      %p103 = por %p101, %p102
      %p104 = scmp.ne.s32.totalorder %s92, %s93
      %p105 = scmp.eq.s32.totalorder %s20, 1
      %p106 = por %p104, %p105
      %p108 = scmp.ne.s32.totalorder %s93, %s107
      %p109 = scmp.eq.s32.totalorder %s20, 0
      %p110 = por %p108, %p109
      %s112 = sadd.s32 %s111, 1
      %p115 = scmp.eq.s32.totalorder %s14, 1
      %p116 = scmp.ne.s32.totalorder %s111, %s113
      %p117 = scmp.eq.s32.totalorder %s14, 0
      %p118 = por %p116, %p117
      %p119 = scmp.ne.s32.totalorder %s111, %s113
      %p120 = scmp.eq.s32.totalorder %s19, 1
      %p121 = por %p119, %p120
      %p122 = scmp.ne.s32.totalorder %s113, %s114
      %p123 = scmp.eq.s32.totalorder %s19, 0
      %p124 = por %p122, %p123
      %p125 = scmp.ne.s32.totalorder %s113, %s114
      %p126 = scmp.eq.s32.totalorder %s20, 1
      %p127 = por %p125, %p126
      %p129 = scmp.ne.s32.totalorder %s114, %s128
      %p130 = scmp.eq.s32.totalorder %s20, 0
      %p131 = por %p129, %p130
      %s132 = ssub.s32 %s14, %s21
      %p133 = scmp.eq.s32.totalorder %s132, 0
      %s135 = sadd.s32 %s134, 1
      %s136 = scalar_select %p133, %s134, %s135
      %p139 = pneg %p133
      %p140 = scmp.eq.s32.totalorder %s14, 1
      %p141 = por %p139, %p140
      %p142 = scmp.ne.s32.totalorder %s134, %s137
      %p143 = scmp.eq.s32.totalorder %s14, 0
      %p144 = por %p142, %p143
      %p145 = scmp.ne.s32.totalorder %s134, %s137
      %p146 = scmp.eq.s32.totalorder %s19, 1
      %p147 = por %p145, %p146
      %p148 = scmp.ne.s32.totalorder %s137, %s138
      %p149 = scmp.eq.s32.totalorder %s19, 0
      %p150 = por %p148, %p149
      %p151 = scmp.ne.s32.totalorder %s137, %s138
      %p152 = scmp.eq.s32.totalorder %s20, 1
      %p153 = por %p151, %p152
      %p155 = scmp.ne.s32.totalorder %s138, %s154
      %p156 = scmp.eq.s32.totalorder %s20, 0
      %p157 = por %p155, %p156
      %p158 = scmp.le.s32.totalorder 1, %s14
      %p159 = scmp.lt.s32.totalorder %s14, 3
      %p160 = pnand %p158, %p159
      %p161 = pneg %p160
      // Predicated region
      $region9: #{adapter_block_forward.3} parent=5 // pred_check
        _
      $region10: #{adapter_block_forward.3} parent=5 // pred_check_branch
        %163 = sbr.rel (%p160) target = $region12
      $region11: #{adapter_block_forward.3} parent=5 // pred_region
        %s164 = ssub.s32 %s14, 1
        // Predicated region
        $region13: #{adapter_block_forward.3} parent=11 // pred_check
          %p165 = pneg %p61
        $region14: #{adapter_block_forward.3} parent=11 // pred_check_branch
          %167 = sbr.rel (%p165) target = $region16
        $region15: #{adapter_block_forward.3} parent=11 // pred_region
          _
        $region16: #{adapter_block_forward.3} parent=11 // pred_fallthru
          _
        // Predicated region
        $region17: #{adapter_block_forward.3} parent=11 // pred_check
          %p168 = pneg %p82
        $region18: #{adapter_block_forward.3} parent=11 // pred_check_branch
          %170 = sbr.rel (%p168) target = $region20
        $region19: #{adapter_block_forward.3} parent=11 // pred_region
          _
        $region20: #{adapter_block_forward.3} parent=11 // pred_fallthru
          _
        // Predicated region
        $region21: #{adapter_block_forward.3} parent=11 // pred_check
          %p171 = pneg %p103
        $region22: #{adapter_block_forward.3} parent=11 // pred_check_branch
          %173 = sbr.rel (%p171) target = $region24
        $region23: #{adapter_block_forward.3} parent=11 // pred_region
          _
        $region24: #{adapter_block_forward.3} parent=11 // pred_fallthru
          _
        // Predicated region
        $region25: #{adapter_block_forward.3} parent=11 // pred_check
          %p174 = pneg %p124
        $region26: #{adapter_block_forward.3} parent=11 // pred_check_branch
          %176 = sbr.rel (%p174) target = $region28
        $region27: #{adapter_block_forward.3} parent=11 // pred_region
          _
        $region28: #{adapter_block_forward.3} parent=11 // pred_fallthru
          _
      $region12: #{adapter_block_forward.3} parent=5 // pred_fallthru
        _
      %p177 = scmp.lt.s32.totalorder %s14, 2
      // Predicated region
      $region29: #{adapter_block_forward.3} parent=5 // pred_check
        %p178 = pneg %p177
      $region30: #{adapter_block_forward.3} parent=5 // pred_check_branch
        %180 = sbr.rel (%p178) target = $region32
      $region31: #{adapter_block_forward.3} parent=5 // pred_region
        // Predicated region
        $region33: #{adapter_block_forward.3} parent=31 // pred_check
          %p181 = pneg %p34
        $region34: #{adapter_block_forward.3} parent=31 // pred_check_branch
          %183 = sbr.rel (%p181) target = $region36
        $region35: #{adapter_block_forward.3} parent=31 // pred_region
          %s184 = smul.u32 2, %s14
          %p185 = scmp.lt.s32.totalorder %s184, 3
          %s186 = scalar_select %p185, %s184, 3
          %s187 = smul.addr %s186, 8
          %s188 = scalar_lea.vmem %s0, %s187
          %s189 = smul.u32 2, %s14
        $region36: #{adapter_block_forward.3} parent=31 // pred_fallthru
          _
      $region32: #{adapter_block_forward.3} parent=5 // pred_fallthru
        _
      %p190 = scmp.le.s32.totalorder 1, %s14
      %p191 = scmp.lt.s32.totalorder %s14, 3
      %p192 = pnand %p190, %p191
      %p193 = pneg %p192
      // Predicated region
      $region37: #{adapter_block_forward.3} parent=5 // pred_check
        _
      $region38: #{adapter_block_forward.3} parent=5 // pred_check_branch
        %195 = sbr.rel (%p192) target = $region40
      $region39: #{adapter_block_forward.3} parent=5 // pred_region
        %s196 = ssub.s32 %s14, 1
        %s197 = smul.u32 2, %s19
        %p198 = scmp.lt.s32.totalorder %s197, 3
        %s199 = scalar_select %p198, %s197, 3
        %s200 = smul.addr %s199, 8
        %s201 = scalar_lea.vmem %s0, %s200
        %p202 = pneg %p40
        %p203 = pneg %p37
        %p204 = pneg %p61
        %p205 = pneg %p58
        %p206 = pneg %p82
        %p207 = pneg %p79
        %p208 = pneg %p103
        %p209 = pneg %p100
        %p210 = pneg %p124
        %p211 = pneg %p121
        %p212 = pneg %p150
        %p213 = pneg %p147
        %s214 = sand.u32 %s137, 1
        %s215 = scalar_lea.sflag [#allocation3], %s214
        %s216 = sand.u32 %s137, 1
        %s217 = smul.addr %s216, 16
        %s218 = scalar_lea.vmem [#allocation2], %s217
        %s219 = smul.u32 2, %s19
        %p220 = scmp.lt.s32.totalorder %s219, 3
        %s221 = scalar_select %p220, %s219, 3
        %s222 = smul.addr %s221, 8
        %s223 = scalar_lea.vmem %s0, %s222
        %s224 = smul.u32 2, %s19
        %s225 = smul.u32 2, %s19
        %v226 = vld [vmem:[%s223] sm:$0xff]
        %v227 = vld [vmem:[%s223 + $0x8] sm:$0xff]
        %v228 = vld [vmem:[%s1] sm:$0xff]
        %v229 = vld [vmem:[%s1 + $0x8] sm:$0xff]
        %v230 = vld [vmem:[%s1 + $0x10] sm:$0xff]
        %v231 = vld [vmem:[%s1 + $0x18] sm:$0xff]
        %v232 = vld [vmem:[%s1 + $0x20] sm:$0xff]
        %v233 = vld [vmem:[%s1 + $0x28] sm:$0xff]
        %v234 = vld [vmem:[%s1 + $0x30] sm:$0xff]
        %v235 = vld [vmem:[%s1 + $0x38] sm:$0xff]
        %v236 = vld [vmem:[%s2] sm:$0x1]
        %v238 = vlaneseq
        %v239 = vshrl.u32 %v238, 7
        %v240 = vsub.s32 0, %v239
        %v241 = vrot.slane %v236, %v240
        %vm243 = vcmask 523264
        %v245 = vsel %vm243, %v226, 0
        %v248 = vsel %vm243, %v227, 0
        %250 = vmatprep.subr.mxu0 0.0
        %251 = vmatpush1.msra.mxu0 %v228
        %252 = vmatprep.subr.mxu0 0.0
        %253 = vmatpush1.msra.mxu0 %v229
        %254 = vmatprep.subr.mxu0 0.0
        %255 = vmatpush1.msra.mxu0 %v230
        %256 = vmatprep.subr.mxu0 0.0
        %257 = vmatpush1.msra.mxu0 %v231
        %258 = vmatprep.subr.mxu0 0.0
        %259 = vmatpush1.msra.mxu0 %v232
        %260 = vmatprep.subr.mxu0 0.0
        %261 = vmatpush1.msra.mxu0 %v233
        %262 = vmatprep.subr.mxu0 0.0
        %263 = vmatpush1.msra.mxu0 %v234
        %264 = vmatprep.subr.mxu0 0.0
        %265 = vmatpush1.msra.mxu0 %v235
        %266 = vmatprep.subr.mxu0 0.0
        %267 = vmatpush1.msra.mxu0 0.0
        %268 = vmatprep.subr.mxu0 0.0
        %269 = vmatpush1.msra.mxu0 0.0
        %270 = vmatprep.subr.mxu0 0.0
        %271 = vmatpush1.msra.mxu0 0.0
        %272 = vmatprep.subr.mxu0 0.0
        %273 = vmatpush1.msra.mxu0 0.0
        %274 = vmatprep.subr.mxu0 0.0
        %275 = vmatpush1.msra.mxu0 0.0
        %276 = vmatprep.subr.mxu0 0.0
        %277 = vmatpush1.msra.mxu0 0.0
        %278 = vmatprep.subr.mxu0 0.0
        %279 = vmatpush1.msra.mxu0 0.0
        %280 = vmatprep.subr.mxu0 0.0
        %281 = vmatpush1.msra.mxu0 0.0
        %282 = vmatprep.subr.mxu0 0.0
        %283 = vmatpush1.msra.mxu0 0.0
        %284 = vmatprep.subr.mxu0 0.0
        %285 = vmatpush1.msra.mxu0 0.0
        %286 = vmatprep.subr.mxu0 0.0
        %287 = vmatpush1.msra.mxu0 0.0
        %288 = vmatprep.subr.mxu0 0.0
        %289 = vmatpush1.msra.mxu0 0.0
        %290 = vmatprep.subr.mxu0 0.0
        %291 = vmatpush1.msra.mxu0 0.0
        %292 = vmatprep.subr.mxu0 0.0
        %293 = vmatpush1.msra.mxu0 0.0
        %294 = vmatprep.subr.mxu0 0.0
        %295 = vmatpush1.msra.mxu0 0.0
        %296 = vmatprep.subr.mxu0 0.0
        %297 = vmatpush1.msra.mxu0 0.0
        %298 = vmatprep.subr.mxu0 0.0
        %299 = vmatpush1.msra.mxu0 0.0
        %300 = vmatprep.subr.mxu0 0.0
        %301 = vmatpush1.msra.mxu0 0.0
        %302 = vmatprep.subr.mxu0 0.0
        %303 = vmatpush1.msra.mxu0 0.0
        %304 = vmatprep.subr.mxu0 0.0
        %305 = vmatpush1.msra.mxu0 0.0
        %306 = vmatprep.subr.mxu0 0.0
        %307 = vmatpush1.msra.mxu0 0.0
        %308 = vmatprep.subr.mxu0 0.0
        %309 = vmatpush1.msra.mxu0 0.0
        %310 = vmatprep.subr.mxu0 0.0
        %311 = vmatpush1.msra.mxu0 0.0
        %312 = vmatprep.subr.mxu0 0.0
        %313 = vmatpush1.msra.mxu0 0.0
        %314 = vmatprep.mubr.f32.mxu0 0.0
        %315 = vmatmul.mubr.f32.gmra.mrb[0].mxu0 %v245
        %v316 = vpop.f32.mrb[0].mxu0
        %v317 = vadd.f32 %v241, %v316
        %v318 = vpop.f32.mrb[0].mxu0
        %319 = vmatprep.mubr.f32.mxu0 0.0
        %320 = vmatmul.mubr.f32.gmra.mrb[0].mxu0 %v248
        %v321 = vpop.f32.mrb[0].mxu0
        %v322 = vadd.f32 %v241, %v321
        %v323 = vpop.f32.mrb[0].mxu0
        %324 = vdwg.mxu0
        %v325 = vxor.u32 %v317, 2147483648
        %v326 = vxor.u32 %v322, 2147483648
        %v327 = vmul.f32 %v325, 1.442695
        %v328 = vpow.pop %v327
        %v329 = vmul.f32 %v326, 1.442695
        %v330 = vpow.pop %v329
        %v331 = vadd.f32 %v328, 1.0
        %v332 = vadd.f32 %v330, 1.0
        %v333 = vrcp.pop %v331
        %v334 = vmul.f32 1.0, %v333
        %v335 = vrcp.pop %v332
        %v336 = vmul.f32 1.0, %v335
        %v337 = vmul.f32 %v317, %v334
        %v338 = vmul.f32 %v322, %v336
        %v339 = vld [vmem:[%s3] sm:$0xff]
        %v340 = vld [vmem:[%s4] sm:$0x1]
        %v342 = vlaneseq
        %v343 = vshrl.u32 %v342, 7
        %v344 = vsub.s32 0, %v343
        %v345 = vrot.slane %v340, %v344
        %vm347 = vcmask 64512
        %v349 = vsel %vm347, %v337, 0
        %v352 = vsel %vm347, %v338, 0
        %354 = vmatprep.subr.mxu0 0.0
        %355 = vmatpush1.msra.mxu0 %v339
        %356 = vmatprep.subr.mxu0 0.0
        %357 = vmatpush1.msra.mxu0 0.0
        %358 = vmatprep.subr.mxu0 0.0
        %359 = vmatpush1.msra.mxu0 0.0
        %360 = vmatprep.subr.mxu0 0.0
        %361 = vmatpush1.msra.mxu0 0.0
        %362 = vmatprep.subr.mxu0 0.0
        %363 = vmatpush1.msra.mxu0 0.0
        %364 = vmatprep.subr.mxu0 0.0
        %365 = vmatpush1.msra.mxu0 0.0
        %366 = vmatprep.subr.mxu0 0.0
        %367 = vmatpush1.msra.mxu0 0.0
        %368 = vmatprep.subr.mxu0 0.0
        %369 = vmatpush1.msra.mxu0 0.0
        %370 = vmatprep.subr.mxu0 0.0
        %371 = vmatpush1.msra.mxu0 0.0
        %372 = vmatprep.subr.mxu0 0.0
        %373 = vmatpush1.msra.mxu0 0.0
        %374 = vmatprep.subr.mxu0 0.0
        %375 = vmatpush1.msra.mxu0 0.0
        %376 = vmatprep.subr.mxu0 0.0
        %377 = vmatpush1.msra.mxu0 0.0
        %378 = vmatprep.subr.mxu0 0.0
        %379 = vmatpush1.msra.mxu0 0.0
        %380 = vmatprep.subr.mxu0 0.0
        %381 = vmatpush1.msra.mxu0 0.0
        %382 = vmatprep.subr.mxu0 0.0
        %383 = vmatpush1.msra.mxu0 0.0
        %384 = vmatprep.subr.mxu0 0.0
        %385 = vmatpush1.msra.mxu0 0.0
        %386 = vmatprep.subr.mxu0 0.0
        %387 = vmatpush1.msra.mxu0 0.0
        %388 = vmatprep.subr.mxu0 0.0
        %389 = vmatpush1.msra.mxu0 0.0
        %390 = vmatprep.subr.mxu0 0.0
        %391 = vmatpush1.msra.mxu0 0.0
        %392 = vmatprep.subr.mxu0 0.0
        %393 = vmatpush1.msra.mxu0 0.0
        %394 = vmatprep.subr.mxu0 0.0
        %395 = vmatpush1.msra.mxu0 0.0
        %396 = vmatprep.subr.mxu0 0.0
        %397 = vmatpush1.msra.mxu0 0.0
        %398 = vmatprep.subr.mxu0 0.0
        %399 = vmatpush1.msra.mxu0 0.0
        %400 = vmatprep.subr.mxu0 0.0
        %401 = vmatpush1.msra.mxu0 0.0
        %402 = vmatprep.subr.mxu0 0.0
        %403 = vmatpush1.msra.mxu0 0.0
        %404 = vmatprep.subr.mxu0 0.0
        %405 = vmatpush1.msra.mxu0 0.0
        %406 = vmatprep.subr.mxu0 0.0
        %407 = vmatpush1.msra.mxu0 0.0
        %408 = vmatprep.subr.mxu0 0.0
        %409 = vmatpush1.msra.mxu0 0.0
        %410 = vmatprep.subr.mxu0 0.0
        %411 = vmatpush1.msra.mxu0 0.0
        %412 = vmatprep.subr.mxu0 0.0
        %413 = vmatpush1.msra.mxu0 0.0
        %414 = vmatprep.subr.mxu0 0.0
        %415 = vmatpush1.msra.mxu0 0.0
        %416 = vmatprep.subr.mxu0 0.0
        %417 = vmatpush1.msra.mxu0 0.0
        %418 = vmatprep.mubr.f32.mxu0 0.0
        %419 = vmatmul.mubr.f32.gmra.mrb[0].mxu0 %v349
        %v420 = vpop.f32.mrb[0].mxu0
        %v421 = vadd.f32 %v345, %v420
        %v422 = vpop.f32.mrb[0].mxu0
        %423 = vmatprep.mubr.f32.mxu0 0.0
        %424 = vmatmul.mubr.f32.gmra.mrb[0].mxu0 %v352
        %v425 = vpop.f32.mrb[0].mxu0
        %v426 = vadd.f32 %v345, %v425
        %v427 = vpop.f32.mrb[0].mxu0
        %428 = vdwg.mxu0
        %v429 = vadd.f32 %v421, %v226
        %v430 = vadd.f32 %v426, %v227
        %431 = vst.msk [vmem:[%s218] sm:$0xff] %vm243, %v429
        %432 = vst.msk [vmem:[%s218 + $0x8] sm:$0xff] %vm243, %v430
        %s433 = sand.u32 %s137, 1
        %s434 = scalar_lea.sflag [#allocation3], %s433
        %s435 = sand.u32 %s137, 1
        %s436 = smul.addr %s435, 16
        %s437 = scalar_lea.vmem [#allocation2], %s436
        // Predicated region
        $region41: #{adapter_block_forward.3} parent=39 // pred_check
          %p438 = pneg %p147
        $region42: #{adapter_block_forward.3} parent=39 // pred_check_branch
          %440 = sbr.rel (%p438) target = $region44
        $region43: #{adapter_block_forward.3} parent=39 // pred_region
          %s441 = smul.u32 2, %s19
          %s443 = ssub.s32 256, 256
          %444 = vsyncadd %s434, %s443
          %s445 = smul.addr %s441, 128
          %s446 = scalar_lea.hbm %s5, %s445
          %s447 = sshll.u32 %s437, 4
          %s448 = int_to_ptr.vmem [resolvable:$true] %s447
          %453 = dma.vmem_to_hbm [thread:$0]  %s448, 256, %s446, %s434, 128, 128, 8
        $region44: #{adapter_block_forward.3} parent=39 // pred_fallthru
          _
      $region40: #{adapter_block_forward.3} parent=5 // pred_fallthru
        _
      %p454 = scmp.le.s32.totalorder 2, %s14
      // Predicated region
      $region45: #{adapter_block_forward.3} parent=5 // pred_check
        %p455 = pneg %p454
      $region46: #{adapter_block_forward.3} parent=5 // pred_check_branch
        %457 = sbr.rel (%p455) target = $region48
      $region47: #{adapter_block_forward.3} parent=5 // pred_region
        %s458 = ssub.s32 %s14, 2
        // Predicated region
        $region49: #{adapter_block_forward.3} parent=47 // pred_check
          %p459 = pneg %p153
        $region50: #{adapter_block_forward.3} parent=47 // pred_check_branch
          %461 = sbr.rel (%p459) target = $region52
        $region51: #{adapter_block_forward.3} parent=47 // pred_region
          %s462 = sand.u32 %s138, 1
          %s463 = scalar_lea.sflag [#allocation3], %s462
          %s464 = sand.u32 %s138, 1
          %s465 = smul.addr %s464, 16
          %s466 = scalar_lea.vmem [#allocation2], %s465
          %467 = dma.done %s463, 256
        $region52: #{adapter_block_forward.3} parent=47 // pred_fallthru
          _
      $region48: #{adapter_block_forward.3} parent=5 // pred_fallthru
        _
    $region6: #{adapter_block_forward.3} parent=1 // loop_footer
      %s18 = sadd.s32 1, %s14
    $region7: #{adapter_block_forward.3} parent=1 // loop_footer_branch
      %13 = sbr.rel target = $region3
    $region8: #{adapter_block_forward.3} parent=1 // loop_exit
      _
    %468 = vsyncpa [#allocation3], 1
    %s469 = scalar_lea.sflag [#allocation3], 1
    %470 = vsyncpa %s469, 1

// kernel: adapter_block_forward.2
$region0: #{adapter_block_forward.2}
  #allocation0 [shape = 'u32[]', space=smem, size = 0x4, offset = 0x4, fixed_abs, tag = 'smem constant byte address 0x4 - core index']
  #allocation1 [shape = 'u32[144,128]{1,0:T(1,128)}', space=vmem, size = 0x12000, scoped, tag = 'internal scratch']
  %s0 = inlined_call_operand.vmem [shape: f32[16,32], index: 0, kind: input, shape index: {}]
  %s1 = inlined_call_operand.vmem [shape: f32[32,8], index: 1, kind: input, shape index: {}]
  %s2 = inlined_call_operand.vmem [shape: f32[1,8], index: 2, kind: input, shape index: {}]
  %s3 = inlined_call_operand.vmem [shape: f32[8,32], index: 3, kind: input, shape index: {}]
  %s4 = inlined_call_operand.vmem [shape: f32[1,32], index: 4, kind: input, shape index: {}]
  %s5 = inlined_call_operand.hbm [shape: f32[16,32], index: 5, kind: output, shape index: {}]
  %s6 = sld [smem:[#allocation0]]
  $region53: #{adapter_block_forward.2} parent=0
    _
  %s8 = ssub.s32 1, %s6
  %s9 = scalar_select 0, %s8, %s6
  $region1: #{adapter_block_forward.2} parent=0
    #allocation2 [shape = 'u8[8192]{0}', space=vmem, size = 0x2000, scoped, tag = 'output window, operand 0']
    #allocation3 [shape = 's32[2]{0}', space=sflag, size = 0x8, scoped, tag = 'scoped memory for adapter_block_forward.2']
    %10 = vsyncpa [#allocation3], 0
    %s11 = scalar_lea.sflag [#allocation3], 1
    %12 = vsyncpa %s11, 0
    loop: start=0, step=1, limit=4
    $region2: #{adapter_block_forward.2} parent=1 // loop_pre_header
      _
    $region3: #{adapter_block_forward.2} parent=1 // loop_header
      %s14 = sphi 0, %s18
      %p15 = scmp.ge.s32.totalorder %s14, 4
      %s24 = sphi 0, %s26
      %s27 = sphi 0, %s24
      %s28 = sphi 0, %s27
      %s44 = sphi 0, %s28
      %s48 = sphi 0, %s48
      %s50 = sphi 0, %s48
      %s51 = sphi 0, %s50
      %s65 = sphi 0, %s51
      %s69 = sphi 0, %s69
      %s71 = sphi 0, %s69
      %s72 = sphi 0, %s71
      %s86 = sphi 0, %s72
      %s90 = sphi 0, %s90
      %s92 = sphi 0, %s90
      %s93 = sphi 0, %s92
      %s107 = sphi 0, %s93
      %s111 = sphi 0, %s111
      %s113 = sphi 0, %s111
      %s114 = sphi 0, %s113
      %s128 = sphi 0, %s114
      %s134 = sphi 0, %s136
      %s137 = sphi 0, %s134
      %s138 = sphi 0, %s137
      %s154 = sphi 0, %s138
    $region4: #{adapter_block_forward.2} parent=1 // loop_header_branch
      %17 = sbr.rel (%p15) target = $region8
    $region5: #{adapter_block_forward.2} parent=1 // loop_body
      %s19 = ssub.s32 %s14, 1
      %s20 = ssub.s32 %s14, 2
      %s21 = sadd.s32 %s14, 1
      %s22 = ssub.s32 %s14, %s21
      %p23 = scmp.eq.s32.totalorder %s22, 0
      %s25 = sadd.s32 %s24, 1
      %s26 = scalar_select %p23, %s24, %s25
      %p29 = pneg %p23
      %p30 = scmp.eq.s32.totalorder %s14, 1
      %p31 = por %p29, %p30
      %p32 = scmp.ne.s32.totalorder %s24, %s27
      %p33 = scmp.eq.s32.totalorder %s14, 0
      %p34 = por %p32, %p33
      %p35 = scmp.ne.s32.totalorder %s24, %s27
      %p36 = scmp.eq.s32.totalorder %s19, 1
      %p37 = por %p35, %p36
      %p38 = scmp.ne.s32.totalorder %s27, %s28
      %p39 = scmp.eq.s32.totalorder %s19, 0
      %p40 = por %p38, %p39
      %p41 = scmp.ne.s32.totalorder %s27, %s28
      %p42 = scmp.eq.s32.totalorder %s20, 1
      %p43 = por %p41, %p42
      %p45 = scmp.ne.s32.totalorder %s28, %s44
      %p46 = scmp.eq.s32.totalorder %s20, 0
      %p47 = por %p45, %p46
      %s49 = sadd.s32 %s48, 1
      %p52 = scmp.eq.s32.totalorder %s14, 1
      %p53 = scmp.ne.s32.totalorder %s48, %s50
      %p54 = scmp.eq.s32.totalorder %s14, 0
      %p55 = por %p53, %p54
      %p56 = scmp.ne.s32.totalorder %s48, %s50
      %p57 = scmp.eq.s32.totalorder %s19, 1
      %p58 = por %p56, %p57
      %p59 = scmp.ne.s32.totalorder %s50, %s51
      %p60 = scmp.eq.s32.totalorder %s19, 0
      %p61 = por %p59, %p60
      %p62 = scmp.ne.s32.totalorder %s50, %s51
      %p63 = scmp.eq.s32.totalorder %s20, 1
      %p64 = por %p62, %p63
      %p66 = scmp.ne.s32.totalorder %s51, %s65
      %p67 = scmp.eq.s32.totalorder %s20, 0
      %p68 = por %p66, %p67
      %s70 = sadd.s32 %s69, 1
      %p73 = scmp.eq.s32.totalorder %s14, 1
      %p74 = scmp.ne.s32.totalorder %s69, %s71
      %p75 = scmp.eq.s32.totalorder %s14, 0
      %p76 = por %p74, %p75
      %p77 = scmp.ne.s32.totalorder %s69, %s71
      %p78 = scmp.eq.s32.totalorder %s19, 1
      %p79 = por %p77, %p78
      %p80 = scmp.ne.s32.totalorder %s71, %s72
      %p81 = scmp.eq.s32.totalorder %s19, 0
      %p82 = por %p80, %p81
      %p83 = scmp.ne.s32.totalorder %s71, %s72
      %p84 = scmp.eq.s32.totalorder %s20, 1
      %p85 = por %p83, %p84
      %p87 = scmp.ne.s32.totalorder %s72, %s86
      %p88 = scmp.eq.s32.totalorder %s20, 0
      %p89 = por %p87, %p88
      %s91 = sadd.s32 %s90, 1
      %p94 = scmp.eq.s32.totalorder %s14, 1
      %p95 = scmp.ne.s32.totalorder %s90, %s92
      %p96 = scmp.eq.s32.totalorder %s14, 0
      %p97 = por %p95, %p96
      %p98 = scmp.ne.s32.totalorder %s90, %s92
      %p99 = scmp.eq.s32.totalorder %s19, 1
      %p100 = por %p98, %p99
      %p101 = scmp.ne.s32.totalorder %s92, %s93
      %p102 = scmp.eq.s32.totalorder %s19, 0
      %p103 = por %p101, %p102
      %p104 = scmp.ne.s32.totalorder %s92, %s93
      %p105 = scmp.eq.s32.totalorder %s20, 1
      %p106 = por %p104, %p105
      %p108 = scmp.ne.s32.totalorder %s93, %s107
      %p109 = scmp.eq.s32.totalorder %s20, 0
      %p110 = por %p108, %p109
      %s112 = sadd.s32 %s111, 1
      %p115 = scmp.eq.s32.totalorder %s14, 1
      %p116 = scmp.ne.s32.totalorder %s111, %s113
      %p117 = scmp.eq.s32.totalorder %s14, 0
      %p118 = por %p116, %p117
      %p119 = scmp.ne.s32.totalorder %s111, %s113
      %p120 = scmp.eq.s32.totalorder %s19, 1
      %p121 = por %p119, %p120
      %p122 = scmp.ne.s32.totalorder %s113, %s114
      %p123 = scmp.eq.s32.totalorder %s19, 0
      %p124 = por %p122, %p123
      %p125 = scmp.ne.s32.totalorder %s113, %s114
      %p126 = scmp.eq.s32.totalorder %s20, 1
      %p127 = por %p125, %p126
      %p129 = scmp.ne.s32.totalorder %s114, %s128
      %p130 = scmp.eq.s32.totalorder %s20, 0
      %p131 = por %p129, %p130
      %s132 = ssub.s32 %s14, %s21
      %p133 = scmp.eq.s32.totalorder %s132, 0
      %s135 = sadd.s32 %s134, 1
      %s136 = scalar_select %p133, %s134, %s135
      %p139 = pneg %p133
      %p140 = scmp.eq.s32.totalorder %s14, 1
      %p141 = por %p139, %p140
      %p142 = scmp.ne.s32.totalorder %s134, %s137
      %p143 = scmp.eq.s32.totalorder %s14, 0
      %p144 = por %p142, %p143
      %p145 = scmp.ne.s32.totalorder %s134, %s137
      %p146 = scmp.eq.s32.totalorder %s19, 1
      %p147 = por %p145, %p146
      %p148 = scmp.ne.s32.totalorder %s137, %s138
      %p149 = scmp.eq.s32.totalorder %s19, 0
      %p150 = por %p148, %p149
      %p151 = scmp.ne.s32.totalorder %s137, %s138
      %p152 = scmp.eq.s32.totalorder %s20, 1
      %p153 = por %p151, %p152
      %p155 = scmp.ne.s32.totalorder %s138, %s154
      %p156 = scmp.eq.s32.totalorder %s20, 0
      %p157 = por %p155, %p156
      %p158 = scmp.le.s32.totalorder 1, %s14
      %p159 = scmp.lt.s32.totalorder %s14, 3
      %p160 = pnand %p158, %p159
      %p161 = pneg %p160
      // Predicated region
      $region9: #{adapter_block_forward.2} parent=5 // pred_check
        _
      $region10: #{adapter_block_forward.2} parent=5 // pred_check_branch
        %163 = sbr.rel (%p160) target = $region12
      $region11: #{adapter_block_forward.2} parent=5 // pred_region
        %s164 = ssub.s32 %s14, 1
        // Predicated region
        $region13: #{adapter_block_forward.2} parent=11 // pred_check
          %p165 = pneg %p61
        $region14: #{adapter_block_forward.2} parent=11 // pred_check_branch
          %167 = sbr.rel (%p165) target = $region16
        $region15: #{adapter_block_forward.2} parent=11 // pred_region
          _
        $region16: #{adapter_block_forward.2} parent=11 // pred_fallthru
          _
        // Predicated region
        $region17: #{adapter_block_forward.2} parent=11 // pred_check
          %p168 = pneg %p82
        $region18: #{adapter_block_forward.2} parent=11 // pred_check_branch
          %170 = sbr.rel (%p168) target = $region20
        $region19: #{adapter_block_forward.2} parent=11 // pred_region
          _
        $region20: #{adapter_block_forward.2} parent=11 // pred_fallthru
          _
        // Predicated region
        $region21: #{adapter_block_forward.2} parent=11 // pred_check
          %p171 = pneg %p103
        $region22: #{adapter_block_forward.2} parent=11 // pred_check_branch
          %173 = sbr.rel (%p171) target = $region24
        $region23: #{adapter_block_forward.2} parent=11 // pred_region
          _
        $region24: #{adapter_block_forward.2} parent=11 // pred_fallthru
          _
        // Predicated region
        $region25: #{adapter_block_forward.2} parent=11 // pred_check
          %p174 = pneg %p124
        $region26: #{adapter_block_forward.2} parent=11 // pred_check_branch
          %176 = sbr.rel (%p174) target = $region28
        $region27: #{adapter_block_forward.2} parent=11 // pred_region
          _
        $region28: #{adapter_block_forward.2} parent=11 // pred_fallthru
          _
      $region12: #{adapter_block_forward.2} parent=5 // pred_fallthru
        _
      %p177 = scmp.lt.s32.totalorder %s14, 2
      // Predicated region
      $region29: #{adapter_block_forward.2} parent=5 // pred_check
        %p178 = pneg %p177
      $region30: #{adapter_block_forward.2} parent=5 // pred_check_branch
        %180 = sbr.rel (%p178) target = $region32
      $region31: #{adapter_block_forward.2} parent=5 // pred_region
        // Predicated region
        $region33: #{adapter_block_forward.2} parent=31 // pred_check
          %p181 = pneg %p34
        $region34: #{adapter_block_forward.2} parent=31 // pred_check_branch
          %183 = sbr.rel (%p181) target = $region36
        $region35: #{adapter_block_forward.2} parent=31 // pred_region
          %p184 = scmp.lt.s32.totalorder %s14, 1
          %s185 = scalar_select %p184, %s14, 1
          %s186 = smul.addr %s185, 8
          %s187 = scalar_lea.vmem %s0, %s186
        $region36: #{adapter_block_forward.2} parent=31 // pred_fallthru
          _
      $region32: #{adapter_block_forward.2} parent=5 // pred_fallthru
        _
      %p188 = scmp.le.s32.totalorder 1, %s14
      %p189 = scmp.lt.s32.totalorder %s14, 3
      %p190 = pnand %p188, %p189
      %p191 = pneg %p190
      // Predicated region
      $region37: #{adapter_block_forward.2} parent=5 // pred_check
        _
      $region38: #{adapter_block_forward.2} parent=5 // pred_check_branch
        %193 = sbr.rel (%p190) target = $region40
      $region39: #{adapter_block_forward.2} parent=5 // pred_region
        %s194 = ssub.s32 %s14, 1
        %p195 = scmp.lt.s32.totalorder %s19, 1
        %s196 = scalar_select %p195, %s19, 1
        %s197 = smul.addr %s196, 8
        %s198 = scalar_lea.vmem %s0, %s197
        %p199 = pneg %p40
        %p200 = pneg %p37
        %p201 = pneg %p61
        %p202 = pneg %p58
        %p203 = pneg %p82
        %p204 = pneg %p79
        %p205 = pneg %p103
        %p206 = pneg %p100
        %p207 = pneg %p124
        %p208 = pneg %p121
        %p209 = pneg %p150
        %p210 = pneg %p147
        %s211 = sand.u32 %s137, 1
        %s212 = scalar_lea.sflag [#allocation3], %s211
        %s213 = sand.u32 %s137, 1
        %s214 = smul.addr %s213, 8
        %s215 = scalar_lea.vmem [#allocation2], %s214
        %p216 = scmp.lt.s32.totalorder %s19, 1
        %s217 = scalar_select %p216, %s19, 1
        %s218 = smul.addr %s217, 8
        %s219 = scalar_lea.vmem %s0, %s218
        %v220 = vld [vmem:[%s219] sm:$0xff]
        %v221 = vld [vmem:[%s1] sm:$0xff]
        %v222 = vld [vmem:[%s1 + $0x8] sm:$0xff]
        %v223 = vld [vmem:[%s1 + $0x10] sm:$0xff]
        %v224 = vld [vmem:[%s1 + $0x18] sm:$0xff]
        %v225 = vld [vmem:[%s2] sm:$0x1]
        %v227 = vlaneseq
        %v228 = vshrl.u32 %v227, 7
        %v229 = vsub.s32 0, %v228
        %v230 = vrot.slane %v225, %v229
        %vm232 = vcmask 261120
        %v234 = vsel %vm232, %v220, 0
        %236 = vmatprep.subr.mxu0 0.0
        %237 = vmatpush1.msra.mxu0 %v221
        %238 = vmatprep.subr.mxu0 0.0
        %239 = vmatpush1.msra.mxu0 %v222
        %240 = vmatprep.subr.mxu0 0.0
        %241 = vmatpush1.msra.mxu0 %v223
        %242 = vmatprep.subr.mxu0 0.0
        %243 = vmatpush1.msra.mxu0 %v224
        %244 = vmatprep.subr.mxu0 0.0
        %245 = vmatpush1.msra.mxu0 0.0
        %246 = vmatprep.subr.mxu0 0.0
        %247 = vmatpush1.msra.mxu0 0.0
        %248 = vmatprep.subr.mxu0 0.0
        %249 = vmatpush1.msra.mxu0 0.0
        %250 = vmatprep.subr.mxu0 0.0
        %251 = vmatpush1.msra.mxu0 0.0
        %252 = vmatprep.subr.mxu0 0.0
        %253 = vmatpush1.msra.mxu0 0.0
        %254 = vmatprep.subr.mxu0 0.0
        %255 = vmatpush1.msra.mxu0 0.0
        %256 = vmatprep.subr.mxu0 0.0
        %257 = vmatpush1.msra.mxu0 0.0
        %258 = vmatprep.subr.mxu0 0.0
        %259 = vmatpush1.msra.mxu0 0.0
        %260 = vmatprep.subr.mxu0 0.0
        %261 = vmatpush1.msra.mxu0 0.0
        %262 = vmatprep.subr.mxu0 0.0
        %263 = vmatpush1.msra.mxu0 0.0
        %264 = vmatprep.subr.mxu0 0.0
        %265 = vmatpush1.msra.mxu0 0.0
        %266 = vmatprep.subr.mxu0 0.0
        %267 = vmatpush1.msra.mxu0 0.0
        %268 = vmatprep.subr.mxu0 0.0
        %269 = vmatpush1.msra.mxu0 0.0
        %270 = vmatprep.subr.mxu0 0.0
        %271 = vmatpush1.msra.mxu0 0.0
        %272 = vmatprep.subr.mxu0 0.0
        %273 = vmatpush1.msra.mxu0 0.0
        %274 = vmatprep.subr.mxu0 0.0
        %275 = vmatpush1.msra.mxu0 0.0
        %276 = vmatprep.subr.mxu0 0.0
        %277 = vmatpush1.msra.mxu0 0.0
        %278 = vmatprep.subr.mxu0 0.0
        %279 = vmatpush1.msra.mxu0 0.0
        %280 = vmatprep.subr.mxu0 0.0
        %281 = vmatpush1.msra.mxu0 0.0
        %282 = vmatprep.subr.mxu0 0.0
        %283 = vmatpush1.msra.mxu0 0.0
        %284 = vmatprep.subr.mxu0 0.0
        %285 = vmatpush1.msra.mxu0 0.0
        %286 = vmatprep.subr.mxu0 0.0
        %287 = vmatpush1.msra.mxu0 0.0
        %288 = vmatprep.subr.mxu0 0.0
        %289 = vmatpush1.msra.mxu0 0.0
        %290 = vmatprep.subr.mxu0 0.0
        %291 = vmatpush1.msra.mxu0 0.0
        %292 = vmatprep.subr.mxu0 0.0
        %293 = vmatpush1.msra.mxu0 0.0
        %294 = vmatprep.subr.mxu0 0.0
        %295 = vmatpush1.msra.mxu0 0.0
        %296 = vmatprep.subr.mxu0 0.0
        %297 = vmatpush1.msra.mxu0 0.0
        %298 = vmatprep.subr.mxu0 0.0
        %299 = vmatpush1.msra.mxu0 0.0
        %300 = vmatprep.mubr.f32.mxu0 0.0
        %301 = vmatmul.mubr.f32.gmra.mrb[0].mxu0 %v234
        %v302 = vpop.f32.mrb[0].mxu0
        %v303 = vadd.f32 %v230, %v302
        %v304 = vpop.f32.mrb[0].mxu0
        %305 = vdwg.mxu0
        %v306 = vxor.u32 %v303, 2147483648
        %v307 = vmul.f32 %v306, 1.442695
        %v308 = vpow.pop %v307
        %v309 = vadd.f32 %v308, 1.0
        %v310 = vrcp.pop %v309
        %v311 = vmul.f32 1.0, %v310
        %v312 = vmul.f32 %v303, %v311
        %v313 = vld [vmem:[%s3] sm:$0xff]
        %v314 = vld [vmem:[%s4] sm:$0x1]
        %v316 = vlaneseq
        %v317 = vshrl.u32 %v316, 7
        %v318 = vsub.s32 0, %v317
        %v319 = vrot.slane %v314, %v318
        %vm321 = vcmask 64512
        %v323 = vsel %vm321, %v312, 0
        %325 = vmatprep.subr.mxu0 0.0
        %326 = vmatpush1.msra.mxu0 %v313
        %327 = vmatprep.subr.mxu0 0.0
        %328 = vmatpush1.msra.mxu0 0.0
        %329 = vmatprep.subr.mxu0 0.0
        %330 = vmatpush1.msra.mxu0 0.0
        %331 = vmatprep.subr.mxu0 0.0
        %332 = vmatpush1.msra.mxu0 0.0
        %333 = vmatprep.subr.mxu0 0.0
        %334 = vmatpush1.msra.mxu0 0.0
        %335 = vmatprep.subr.mxu0 0.0
        %336 = vmatpush1.msra.mxu0 0.0
        %337 = vmatprep.subr.mxu0 0.0
        %338 = vmatpush1.msra.mxu0 0.0
        %339 = vmatprep.subr.mxu0 0.0
        %340 = vmatpush1.msra.mxu0 0.0
        %341 = vmatprep.subr.mxu0 0.0
        %342 = vmatpush1.msra.mxu0 0.0
        %343 = vmatprep.subr.mxu0 0.0
        %344 = vmatpush1.msra.mxu0 0.0
        %345 = vmatprep.subr.mxu0 0.0
        %346 = vmatpush1.msra.mxu0 0.0
        %347 = vmatprep.subr.mxu0 0.0
        %348 = vmatpush1.msra.mxu0 0.0
        %349 = vmatprep.subr.mxu0 0.0
        %350 = vmatpush1.msra.mxu0 0.0
        %351 = vmatprep.subr.mxu0 0.0
        %352 = vmatpush1.msra.mxu0 0.0
        %353 = vmatprep.subr.mxu0 0.0
        %354 = vmatpush1.msra.mxu0 0.0
        %355 = vmatprep.subr.mxu0 0.0
        %356 = vmatpush1.msra.mxu0 0.0
        %357 = vmatprep.subr.mxu0 0.0
        %358 = vmatpush1.msra.mxu0 0.0
        %359 = vmatprep.subr.mxu0 0.0
        %360 = vmatpush1.msra.mxu0 0.0
        %361 = vmatprep.subr.mxu0 0.0
        %362 = vmatpush1.msra.mxu0 0.0
        %363 = vmatprep.subr.mxu0 0.0
        %364 = vmatpush1.msra.mxu0 0.0
        %365 = vmatprep.subr.mxu0 0.0
        %366 = vmatpush1.msra.mxu0 0.0
        %367 = vmatprep.subr.mxu0 0.0
        %368 = vmatpush1.msra.mxu0 0.0
        %369 = vmatprep.subr.mxu0 0.0
        %370 = vmatpush1.msra.mxu0 0.0
        %371 = vmatprep.subr.mxu0 0.0
        %372 = vmatpush1.msra.mxu0 0.0
        %373 = vmatprep.subr.mxu0 0.0
        %374 = vmatpush1.msra.mxu0 0.0
        %375 = vmatprep.subr.mxu0 0.0
        %376 = vmatpush1.msra.mxu0 0.0
        %377 = vmatprep.subr.mxu0 0.0
        %378 = vmatpush1.msra.mxu0 0.0
        %379 = vmatprep.subr.mxu0 0.0
        %380 = vmatpush1.msra.mxu0 0.0
        %381 = vmatprep.subr.mxu0 0.0
        %382 = vmatpush1.msra.mxu0 0.0
        %383 = vmatprep.subr.mxu0 0.0
        %384 = vmatpush1.msra.mxu0 0.0
        %385 = vmatprep.subr.mxu0 0.0
        %386 = vmatpush1.msra.mxu0 0.0
        %387 = vmatprep.subr.mxu0 0.0
        %388 = vmatpush1.msra.mxu0 0.0
        %389 = vmatprep.mubr.f32.mxu0 0.0
        %390 = vmatmul.mubr.f32.gmra.mrb[0].mxu0 %v323
        %v391 = vpop.f32.mrb[0].mxu0
        %v392 = vadd.f32 %v319, %v391
        %v393 = vpop.f32.mrb[0].mxu0
        %394 = vdwg.mxu0
        %v395 = vadd.f32 %v392, %v220
        %396 = vst.msk [vmem:[%s215] sm:$0xff] %vm232, %v395
        %s397 = sand.u32 %s137, 1
        %s398 = scalar_lea.sflag [#allocation3], %s397
        %s399 = sand.u32 %s137, 1
        %s400 = smul.addr %s399, 8
        %s401 = scalar_lea.vmem [#allocation2], %s400
        // Predicated region
        $region41: #{adapter_block_forward.2} parent=39 // pred_check
          %p402 = pneg %p147
        $region42: #{adapter_block_forward.2} parent=39 // pred_check_branch
          %404 = sbr.rel (%p402) target = $region44
        $region43: #{adapter_block_forward.2} parent=39 // pred_region
          %s406 = ssub.s32 128, 128
          %407 = vsyncadd %s398, %s406
          %s408 = smul.addr %s19, 128
          %s409 = scalar_lea.hbm %s5, %s408
          %s411 = sshll.u32 %s401, 4
          %s412 = int_to_ptr.vmem [resolvable:$true] %s411
          %414 = dma.vmem_to_hbm [thread:$0]  %s412, 128, %s409, %s398
        $region44: #{adapter_block_forward.2} parent=39 // pred_fallthru
          _
      $region40: #{adapter_block_forward.2} parent=5 // pred_fallthru
        _
      %p415 = scmp.le.s32.totalorder 2, %s14
      // Predicated region
      $region45: #{adapter_block_forward.2} parent=5 // pred_check
        %p416 = pneg %p415
      $region46: #{adapter_block_forward.2} parent=5 // pred_check_branch
        %418 = sbr.rel (%p416) target = $region48
      $region47: #{adapter_block_forward.2} parent=5 // pred_region
        %s419 = ssub.s32 %s14, 2
        // Predicated region
        $region49: #{adapter_block_forward.2} parent=47 // pred_check
          %p420 = pneg %p153
        $region50: #{adapter_block_forward.2} parent=47 // pred_check_branch
          %422 = sbr.rel (%p420) target = $region52
        $region51: #{adapter_block_forward.2} parent=47 // pred_region
          %s423 = sand.u32 %s138, 1
          %s424 = scalar_lea.sflag [#allocation3], %s423
          %s425 = sand.u32 %s138, 1
          %s426 = smul.addr %s425, 8
          %s427 = scalar_lea.vmem [#allocation2], %s426
          %428 = dma.done %s424, 128
        $region52: #{adapter_block_forward.2} parent=47 // pred_fallthru
          _
      $region48: #{adapter_block_forward.2} parent=5 // pred_fallthru
        _
    $region6: #{adapter_block_forward.2} parent=1 // loop_footer
      %s18 = sadd.s32 1, %s14
    $region7: #{adapter_block_forward.2} parent=1 // loop_footer_branch
      %13 = sbr.rel target = $region3
    $region8: #{adapter_block_forward.2} parent=1 // loop_exit
      _
    %429 = vsyncpa [#allocation3], 1
    %s430 = scalar_lea.sflag [#allocation3], 1
    %431 = vsyncpa %s430, 1

</llo_original>
